<compile_context>
chip_gen: v6e
topology: v6e:2x2x1
jax: 0.10.0
libtpu: 0.0.40
codegen_flags: <defaults>
</compile_context>

<pallas_src>
import functools

import jax
import jax.numpy as jnp
from jax.experimental import pallas as pl
from jax.experimental.pallas import tpu as pltpu


def _focal_partial_kernel(logits_ref, target_ref, weight_ref, out_ref, *,
                          n_rows, needs_mask):
    """Per-tile weighted-CE partial sums.

    logits_ref: (TN, C)   input dtype (f32 or bf16)
    target_ref: (TN, 1)   int32 class indices
    weight_ref: (1, C)    f32 class weights
    out_ref:    (1, 1, 128) f32; lane 0 <- sum_i w_yi*nll_i, lane 1 <- sum_i w_yi
    """
    i = pl.program_id(0)
    tn, c = logits_ref.shape

    x = logits_ref[...].astype(jnp.float32)           # (TN, C) upcast in-kernel
    t = target_ref[...]                               # (TN, 1) int32
    w = weight_ref[...].astype(jnp.float32)           # (1, C)

    col = jax.lax.broadcasted_iota(jnp.int32, (tn, c), 1)
    hot = col == t                                     # (TN, C) bool

    if needs_mask:
        # Tail tile: padded rows hold unspecified data. Zero their logits before any
        # reduction and drop them from the one-hot so they contribute nothing.
        row = jax.lax.broadcasted_iota(jnp.int32, (tn, 1), 0) + i * tn
        valid = row < n_rows                           # (TN, 1)
        x = jnp.where(valid, x, 0.0)
        hot = jnp.logical_and(hot, valid)

    # Row-wise logsumexp: the only two per-row (XLU) reduction passes.
    m = jnp.max(x, axis=-1, keepdims=True)                               # (TN, 1)
    logz = m + jnp.log(jnp.sum(jnp.exp(x - m), axis=-1, keepdims=True))  # (TN, 1)

    # Class weight folded into the one-hot select; the target-logit gather becomes a
    # whole-tile sum:  sum_i w_{y_i} * (logZ_i - x_{i, y_i}).
    w_hot = jnp.where(hot, w, 0.0)                                       # (TN, C) f32
    s_wnll = jnp.sum(w_hot * (logz - x))                                 # scalar
    s_w = jnp.sum(w_hot)                                                 # scalar

    lane = jax.lax.broadcasted_iota(jnp.int32, out_ref.shape, 2)         # (1, 1, 128)
    out_ref[...] = jnp.where(lane == 0, s_wnll,
                             jnp.where(lane == 1, s_w, 0.0))


def _vmem_ceiling_bytes():
    """Generation-aware scoped-VMEM ceiling (leave headroom for Mosaic internals)."""
    try:
        cap = int(pltpu.get_tpu_info().vmem_capacity_bytes)
    except Exception:
        cap = 64 * 1024 * 1024  # assume the smallest (v7x per-core) if the query fails
    # ~96 MiB on 128 MiB parts (v5e/v6e), ~48 MiB on 64 MiB parts (v7x).
    return min(cap * 3 // 4, cap - 16 * 1024 * 1024)


def _pick_block_rows(n, c, itemsize):
    """Rows per tile sized by input bytes (~4 MiB of logits) so the auto pipeline runs
    near the HBM roofline, capped so f32 temporaries and the lane-padded targets
    buffer stay VMEM-safe on every generation."""
    c = max(int(c), 1)
    rows_by_input = (4 * 1024 * 1024) // (c * itemsize)     # ~4 MiB of logits per tile
    rows_by_f32_tmp = (8 * 1024 * 1024) // (c * 4)          # largest f32 temp <= 8 MiB
    rows_by_targets = (4 * 1024 * 1024) // (128 * 4)        # padded targets <= 4 MiB/buffer
    rows = max(min(rows_by_input, rows_by_f32_tmp, rows_by_targets), 16)
    if rows >= n:
        return n
    if rows >= 256:
        return (rows // 256) * 256
    return max((rows // 16) * 16, 16)


def focal_loss(logits, targets, *, gamma=0.0, class_weights=None,
               reduction="mean", block_rows=None):
    """Pallas implementation of FocalLoss.forward.

    logits:  (N, C) float array (f32 or bf16 — bf16 is NOT upcast in the wrapper)
    targets: (N,)   int array of class indices
    Returns a scalar f32 (both for reduction='mean' and otherwise, matching the
    PyTorch module where the CE is already mean-reduced).
    """
    del reduction  # scalar either way; kept for signature parity with the module
    N, C = logits.shape

    if class_weights is None:
        w = jnp.ones((1, C), jnp.float32)
    else:
        w = jnp.asarray(class_weights, jnp.float32).reshape(1, C)
    t = jnp.asarray(targets, jnp.int32).reshape(N, 1)

    in_itemsize = jnp.dtype(logits.dtype).itemsize

    # --- tile-size selection ---------------------------------------------------
    if block_rows is not None:
        tn = int(block_rows)
        tn = N if tn >= N else max(16, (tn // 16) * 16)
    else:
        tn = _pick_block_rows(N, C, in_itemsize)
    num_tiles = pl.cdiv(N, tn)
    needs_mask = (N % tn) != 0

    # --- VMEM budget (double-buffered inputs incl. lane-padded targets + f32 temps),
    #     capped by a generation-aware ceiling ----------------------------------
    tile_in_bytes = tn * C * in_itemsize + tn * 128 * 4     # logits tile + padded targets tile
    tile_f32_bytes = tn * C * 4
    need = 2 * tile_in_bytes + 5 * tile_f32_bytes + C * 4 + 2 * 128 * 4
    vmem_bytes = int(min(_vmem_ceiling_bytes(),
                         max(16 * 1024 * 1024, int(need * 1.25))))

    partials = pl.pallas_call(
        functools.partial(_focal_partial_kernel, n_rows=N, needs_mask=needs_mask),
        out_shape=jax.ShapeDtypeStruct((num_tiles, 1, 128), jnp.float32),
        grid=(num_tiles,),
        in_specs=[
            pl.BlockSpec((tn, C), lambda i: (i, 0)),
            pl.BlockSpec((tn, 1), lambda i: (i, 0)),
            pl.BlockSpec((1, C), lambda i: (0, 0)),
        ],
        out_specs=pl.BlockSpec((1, 1, 128), lambda i: (i, 0, 0)),
        compiler_params=pltpu.CompilerParams(
            dimension_semantics=("parallel",),      # independent tiles (megacore friendly)
            vmem_limit_bytes=vmem_bytes),
    )(logits, t, w)

    # Tiny final reduction + focal transform in plain JAX (keeps the grid axis parallel).
    s_wnll = jnp.sum(partials[:, 0, 0])
    s_w = jnp.sum(partials[:, 0, 1])
    ce = s_wnll / s_w                               # PyTorch weighted-mean CE ("logp")
    p = jnp.exp(-ce)
    loss = jnp.maximum(1.0 - p, 0.0) ** gamma * ce  # clamp guards NaN for non-integer gamma
    return loss


def _reference(logits, targets, *, gamma, class_weights=None):
    """Pure-JAX reference matching torch.nn.CrossEntropyLoss + focal transform."""
    logits = logits.astype(jnp.float32)
    logp = jax.nn.log_softmax(logits, axis=-1)
    nll = -jnp.take_along_axis(logp, targets[:, None].astype(jnp.int32), axis=-1)[:, 0]
    if class_weights is None:
        ce = jnp.mean(nll)
    else:
        wv = jnp.asarray(class_weights, jnp.float32)[targets]
        ce = jnp.sum(wv * nll) / jnp.sum(wv)
    p = jnp.exp(-ce)
    return ((1.0 - p) ** gamma) * ce


if __name__ == "__main__":
    key = jax.random.PRNGKey(0)
    k1, k2, k3 = jax.random.split(key, 3)

    # Small shapes consistent with CE over (batch, num_classes); N=50 with
    # block_rows=16 exercises the grid AND the masked tail tile (50 % 16 != 0).
    N, C = 50, 32
    logits = jax.random.normal(k1, (N, C), jnp.float32)
    targets = jax.random.randint(k2, (N,), 0, C, jnp.int32)
    class_weights = jax.random.uniform(k3, (C,), jnp.float32, 0.5, 1.5)

    ok = True
    cases = [
        dict(gamma=0.0, cw=None, dtype=jnp.float32),
        dict(gamma=2.0, cw=None, dtype=jnp.float32),
        dict(gamma=2.0, cw=class_weights, dtype=jnp.float32),
        dict(gamma=2.0, cw=class_weights, dtype=jnp.bfloat16),  # bf16 stays bf16 into the kernel
    ]
    for case in cases:
        x = logits.astype(case["dtype"])
        got = jax.block_until_ready(
            focal_loss(x, targets, gamma=case["gamma"], class_weights=case["cw"],
                       block_rows=16))
        want = _reference(x, targets, gamma=case["gamma"], class_weights=case["cw"])
        if not jnp.allclose(got, want, rtol=2e-5, atol=2e-5):
            ok = False
            print(f"MISMATCH gamma={case['gamma']} dtype={jnp.dtype(case['dtype']).name}: "
                  f"got={got} want={want}")

    # Also exercise the automatic tile-size path (single full-block tile for small N*C).
    got = jax.block_until_ready(
        focal_loss(logits, targets, gamma=2.0, class_weights=class_weights))
    want = _reference(logits, targets, gamma=2.0, class_weights=class_weights)
    if not jnp.allclose(got, want, rtol=2e-5, atol=2e-5):
        ok = False
        print(f"MISMATCH auto-tile: got={got} want={want}")

    if ok:
        print("KERNEL_OK")
</pallas_src>

<mosaic_0001>
module attributes {stable_mosaic.version = 11 : i64} {
  func.func @_focal_partial_kernel(%arg0: i32, %arg1: memref<16x32xf32, #tpu.memory_space<vmem>>, %arg2: memref<16x1xi32, #tpu.memory_space<vmem>>, %arg3: memref<1x32xf32, #tpu.memory_space<vmem>>, %arg4: memref<1x1x128xf32, #tpu.memory_space<vmem>>) attributes {dimension_semantics = [#tpu.dimension_semantics<parallel>], iteration_bounds = array<i64: 4>, scalar_prefetch = 0 : i64, scratch_operands = 0 : i64, tpu.core_type = #tpu.core_type<tc>, window_params = [{transform_indices = @transform_0, window_bounds = array<i64: 16, 32>}, {transform_indices = @transform_1, window_bounds = array<i64: 16, 1>}, {pipeline_mode = #tpu.pipeline_mode<synchronous>, transform_indices = @transform_2, window_bounds = array<i64: 1, 32>}, {transform_indices = @transform_3, window_bounds = array<i64: 1, 1, 128>}]} {
    %c0 = arith.constant 0 : index
    %c0_0 = arith.constant 0 : index
    %0 = vector.load %arg1[%c0, %c0_0] : memref<16x32xf32, #tpu.memory_space<vmem>>, vector<16x32xf32>
    %c0_1 = arith.constant 0 : index
    %c0_2 = arith.constant 0 : index
    %1 = vector.load %arg2[%c0_1, %c0_2] : memref<16x1xi32, #tpu.memory_space<vmem>>, vector<16x1xi32>
    %c0_3 = arith.constant 0 : index
    %c0_4 = arith.constant 0 : index
    %2 = vector.load %arg3[%c0_3, %c0_4] : memref<1x32xf32, #tpu.memory_space<vmem>>, vector<1x32xf32>
    %3 = tpu.iota {dimensions = array<i32: 1>} : vector<16x32xi32>
    %4 = vector.broadcast %1 : vector<16x1xi32> to vector<16x32xi32>
    %5 = arith.cmpi eq, %3, %4 : vector<16x32xi32>
    %6 = tpu.iota {dimensions = array<i32: 0>} : vector<16x1xi32>
    %c16_i32 = arith.constant 16 : i32
    %7 = arith.muli %arg0, %c16_i32 : i32
    %8 = vector.broadcast %7 : i32 to vector<16x1xi32>
    %9 = arith.addi %6, %8 : vector<16x1xi32>
    %c50_i32 = arith.constant 50 : i32
    %10 = vector.broadcast %c50_i32 : i32 to vector<16x1xi32>
    %11 = arith.cmpi slt, %9, %10 : vector<16x1xi32>
    %cst = arith.constant 0.000000e+00 : f32
    %12 = vector.shape_cast %11 : vector<16x1xi1> to vector<16x1xi1>
    %13 = vector.broadcast %12 : vector<16x1xi1> to vector<16x32xi1>
    %14 = vector.broadcast %cst : f32 to vector<16x32xf32>
    %15 = arith.select %13, %0, %14 : vector<16x32xi1>, vector<16x32xf32>
    %16 = vector.broadcast %11 : vector<16x1xi1> to vector<16x32xi1>
    %17 = arith.andi %5, %16 : vector<16x32xi1>
    %cst_5 = arith.constant dense<0xFF800000> : vector<16xf32>
    %18 = vector.multi_reduction <maximumf>, %15, %cst_5 [1] : vector<16x32xf32> to vector<16xf32>
    %19 = vector.shape_cast %18 : vector<16xf32> to vector<16x1xf32>
    %20 = vector.broadcast %19 : vector<16x1xf32> to vector<16x32xf32>
    %21 = arith.subf %15, %20 : vector<16x32xf32>
    %22 = math.exp %21 : vector<16x32xf32>
    %cst_6 = arith.constant dense<0.000000e+00> : vector<16xf32>
    %23 = vector.multi_reduction <add>, %22, %cst_6 [1] : vector<16x32xf32> to vector<16xf32>
    %24 = vector.shape_cast %23 : vector<16xf32> to vector<16x1xf32>
    %25 = math.log %24 : vector<16x1xf32>
    %26 = arith.addf %19, %25 : vector<16x1xf32>
    %cst_7 = arith.constant 0.000000e+00 : f32
    %27 = vector.shape_cast %2 : vector<1x32xf32> to vector<1x32xf32>
    %28 = vector.broadcast %27 : vector<1x32xf32> to vector<16x32xf32>
    %29 = vector.broadcast %cst_7 : f32 to vector<16x32xf32>
    %30 = arith.select %17, %28, %29 : vector<16x32xi1>, vector<16x32xf32>
    %31 = vector.broadcast %26 : vector<16x1xf32> to vector<16x32xf32>
    %32 = arith.subf %31, %15 : vector<16x32xf32>
    %33 = arith.mulf %30, %32 : vector<16x32xf32>
    %34 = vector.shape_cast %33 : vector<16x32xf32> to vector<1x16x32xf32>
    %cst_8 = arith.constant dense<0.000000e+00> : vector<1xf32>
    %35 = vector.multi_reduction <add>, %34, %cst_8 [1, 2] : vector<1x16x32xf32> to vector<1xf32>
    %36 = vector.shape_cast %35 : vector<1xf32> to vector<1x1x1xf32>
    %37 = vector.extract %36[0, 0, 0] : f32 from vector<1x1x1xf32>
    %38 = vector.shape_cast %30 : vector<16x32xf32> to vector<1x16x32xf32>
    %cst_9 = arith.constant dense<0.000000e+00> : vector<1xf32>
    %39 = vector.multi_reduction <add>, %38, %cst_9 [1, 2] : vector<1x16x32xf32> to vector<1xf32>
    %40 = vector.shape_cast %39 : vector<1xf32> to vector<1x1x1xf32>
    %41 = vector.extract %40[0, 0, 0] : f32 from vector<1x1x1xf32>
    %42 = tpu.iota {dimensions = array<i32: 2>} : vector<1x1x128xi32>
    %c0_i32 = arith.constant 0 : i32
    %43 = vector.broadcast %c0_i32 : i32 to vector<1x1x128xi32>
    %44 = arith.cmpi eq, %42, %43 : vector<1x1x128xi32>
    %c1_i32 = arith.constant 1 : i32
    %45 = vector.broadcast %c1_i32 : i32 to vector<1x1x128xi32>
    %46 = arith.cmpi eq, %42, %45 : vector<1x1x128xi32>
    %cst_10 = arith.constant 0.000000e+00 : f32
    %47 = vector.broadcast %41 : f32 to vector<1x1x128xf32>
    %48 = vector.broadcast %cst_10 : f32 to vector<1x1x128xf32>
    %49 = arith.select %46, %47, %48 : vector<1x1x128xi1>, vector<1x1x128xf32>
    %50 = vector.broadcast %37 : f32 to vector<1x1x128xf32>
    %51 = arith.select %44, %50, %49 : vector<1x1x128xi1>, vector<1x1x128xf32>
    %c0_11 = arith.constant 0 : index
    %c0_12 = arith.constant 0 : index
    %c0_13 = arith.constant 0 : index
    %52 = vector.load %arg4[%c0_11, %c0_12, %c0_13] : memref<1x1x128xf32, #tpu.memory_space<vmem>>, vector<1x1x128xf32>
    tpu.vector_store %arg4[%c0_11, %c0_12, %c0_13], %51 {strides = array<i32>} : memref<1x1x128xf32, #tpu.memory_space<vmem>>, vector<1x1x128xf32>,
    return
  }
  func.func @transform_0(%arg0: i32) -> (i32, i32) {
    %c0_i32 = arith.constant 0 : i32
    %c0_i32_0 = arith.constant 0 : i32
    return %arg0, %c0_i32 : i32, i32
  }
  func.func @transform_1(%arg0: i32) -> (i32, i32) {
    %c0_i32 = arith.constant 0 : i32
    %c0_i32_0 = arith.constant 0 : i32
    return %arg0, %c0_i32 : i32, i32
  }
  func.func @transform_2(%arg0: i32) -> (i32, i32) {
    %c0_i32 = arith.constant 0 : i32
    %c0_i32_0 = arith.constant 0 : i32
    %c0_i32_1 = arith.constant 0 : i32
    return %c0_i32, %c0_i32_0 : i32, i32
  }
  func.func @transform_3(%arg0: i32) -> (i32, i32, i32) {
    %c0_i32 = arith.constant 0 : i32
    %c0_i32_0 = arith.constant 0 : i32
    %c0_i32_1 = arith.constant 0 : i32
    return %arg0, %c0_i32, %c0_i32_0 : i32, i32, i32
  }
}

</mosaic_0001>

<llo_original>
// kernel: tpu_custom_call.1
$region0: #{tpu_custom_call.1}
  #allocation0 [shape = 'u32[]', space=smem, size = 0x4, offset = 0x4, fixed_abs, tag = 'smem constant byte address 0x4 - core index']
  #allocation1 [shape = 'u32[144,128]{1,0:T(1,128)}', space=vmem, size = 0x12000, scoped, tag = 'internal scratch']
  %s0 = inlined_call_operand.vmem [shape: f32[50,32], index: 0, kind: input, shape index: {}]
  %s1 = inlined_call_operand.vmem [shape: s32[50,1], index: 1, kind: input, shape index: {}]
  %s2 = inlined_call_operand.vmem [shape: f32[1,32], index: 2, kind: input, shape index: {}]
  %s3 = inlined_call_operand.hbm [shape: f32[4,1,128], index: 3, kind: output, shape index: {}]
  %s4 = sld [smem:[#allocation0]]
  $region45: #{tpu_custom_call.1} parent=0
    _
  %s6 = ssub.s32 1, %s4
  %s7 = scalar_select 0, %s6, %s4
  $region1: #{tpu_custom_call.1} parent=0
    #allocation2 [shape = 'u8[1024]{0}', space=vmem, size = 0x400, scoped, tag = 'output window, operand 0']
    #allocation3 [shape = 's32[2]{0}', space=sflag, size = 0x8, scoped, tag = 'scoped memory for tpu_custom_call.1']
    %8 = vsyncpa [#allocation3], 0
    %s9 = scalar_lea.sflag [#allocation3], 1
    %10 = vsyncpa %s9, 0
    loop: start=0, step=1, limit=6
    $region2: #{tpu_custom_call.1} parent=1 // loop_pre_header
      _
    $region3: #{tpu_custom_call.1} parent=1 // loop_header
      %s12 = sphi 0, %s16
      %p13 = scmp.ge.s32.totalorder %s12, 6
      %s22 = sphi 0, %s24
      %s25 = sphi 0, %s22
      %s26 = sphi 0, %s25
      %s42 = sphi 0, %s26
      %s48 = sphi 0, %s50
      %s51 = sphi 0, %s48
      %s52 = sphi 0, %s51
      %s68 = sphi 0, %s52
      %s72 = sphi 0, %s72
      %s74 = sphi 0, %s72
      %s75 = sphi 0, %s74
      %s89 = sphi 0, %s75
      %s95 = sphi 0, %s97
      %s98 = sphi 0, %s95
      %s99 = sphi 0, %s98
      %s115 = sphi 0, %s99
    $region4: #{tpu_custom_call.1} parent=1 // loop_header_branch
      %15 = sbr.rel (%p13) target = $region8
    $region5: #{tpu_custom_call.1} parent=1 // loop_body
      %s17 = ssub.s32 %s12, 1
      %s18 = ssub.s32 %s12, 2
      %s19 = sadd.s32 %s12, 1
      %s20 = ssub.s32 %s12, %s19
      %p21 = scmp.eq.s32.totalorder %s20, 0
      %s23 = sadd.s32 %s22, 1
      %s24 = scalar_select %p21, %s22, %s23
      %p27 = pneg %p21
      %p28 = scmp.eq.s32.totalorder %s12, 3
      %p29 = por %p27, %p28
      %p30 = scmp.ne.s32.totalorder %s22, %s25
      %p31 = scmp.eq.s32.totalorder %s12, 0
      %p32 = por %p30, %p31
      %p33 = scmp.ne.s32.totalorder %s22, %s25
      %p34 = scmp.eq.s32.totalorder %s17, 3
      %p35 = por %p33, %p34
      %p36 = scmp.ne.s32.totalorder %s25, %s26
      %p37 = scmp.eq.s32.totalorder %s17, 0
      %p38 = por %p36, %p37
      %p39 = scmp.ne.s32.totalorder %s25, %s26
      %p40 = scmp.eq.s32.totalorder %s18, 3
      %p41 = por %p39, %p40
      %p43 = scmp.ne.s32.totalorder %s26, %s42
      %p44 = scmp.eq.s32.totalorder %s18, 0
      %p45 = por %p43, %p44
      %s46 = ssub.s32 %s12, %s19
      %p47 = scmp.eq.s32.totalorder %s46, 0
      %s49 = sadd.s32 %s48, 1
      %s50 = scalar_select %p47, %s48, %s49
      %p53 = pneg %p47
      %p54 = scmp.eq.s32.totalorder %s12, 3
      %p55 = por %p53, %p54
      %p56 = scmp.ne.s32.totalorder %s48, %s51
      %p57 = scmp.eq.s32.totalorder %s12, 0
      %p58 = por %p56, %p57
      %p59 = scmp.ne.s32.totalorder %s48, %s51
      %p60 = scmp.eq.s32.totalorder %s17, 3
      %p61 = por %p59, %p60
      %p62 = scmp.ne.s32.totalorder %s51, %s52
      %p63 = scmp.eq.s32.totalorder %s17, 0
      %p64 = por %p62, %p63
      %p65 = scmp.ne.s32.totalorder %s51, %s52
      %p66 = scmp.eq.s32.totalorder %s18, 3
      %p67 = por %p65, %p66
      %p69 = scmp.ne.s32.totalorder %s52, %s68
      %p70 = scmp.eq.s32.totalorder %s18, 0
      %p71 = por %p69, %p70
      %s73 = sadd.s32 %s72, 1
      %p76 = scmp.eq.s32.totalorder %s12, 3
      %p77 = scmp.ne.s32.totalorder %s72, %s74
      %p78 = scmp.eq.s32.totalorder %s12, 0
      %p79 = por %p77, %p78
      %p80 = scmp.ne.s32.totalorder %s72, %s74
      %p81 = scmp.eq.s32.totalorder %s17, 3
      %p82 = por %p80, %p81
      %p83 = scmp.ne.s32.totalorder %s74, %s75
      %p84 = scmp.eq.s32.totalorder %s17, 0
      %p85 = por %p83, %p84
      %p86 = scmp.ne.s32.totalorder %s74, %s75
      %p87 = scmp.eq.s32.totalorder %s18, 3
      %p88 = por %p86, %p87
      %p90 = scmp.ne.s32.totalorder %s75, %s89
      %p91 = scmp.eq.s32.totalorder %s18, 0
      %p92 = por %p90, %p91
      %s93 = ssub.s32 %s12, %s19
      %p94 = scmp.eq.s32.totalorder %s93, 0
      %s96 = sadd.s32 %s95, 1
      %s97 = scalar_select %p94, %s95, %s96
      %p100 = pneg %p94
      %p101 = scmp.eq.s32.totalorder %s12, 3
      %p102 = por %p100, %p101
      %p103 = scmp.ne.s32.totalorder %s95, %s98
      %p104 = scmp.eq.s32.totalorder %s12, 0
      %p105 = por %p103, %p104
      %p106 = scmp.ne.s32.totalorder %s95, %s98
      %p107 = scmp.eq.s32.totalorder %s17, 3
      %p108 = por %p106, %p107
      %p109 = scmp.ne.s32.totalorder %s98, %s99
      %p110 = scmp.eq.s32.totalorder %s17, 0
      %p111 = por %p109, %p110
      %p112 = scmp.ne.s32.totalorder %s98, %s99
      %p113 = scmp.eq.s32.totalorder %s18, 3
      %p114 = por %p112, %p113
      %p116 = scmp.ne.s32.totalorder %s99, %s115
      %p117 = scmp.eq.s32.totalorder %s18, 0
      %p118 = por %p116, %p117
      %p119 = scmp.le.s32.totalorder 1, %s12
      %p120 = scmp.lt.s32.totalorder %s12, 5
      %p121 = pnand %p119, %p120
      %p122 = pneg %p121
      // Predicated region
      $region9: #{tpu_custom_call.1} parent=5 // pred_check
        _
      $region10: #{tpu_custom_call.1} parent=5 // pred_check_branch
        %124 = sbr.rel (%p121) target = $region12
      $region11: #{tpu_custom_call.1} parent=5 // pred_region
        %s125 = ssub.s32 %s12, 1
        // Predicated region
        $region13: #{tpu_custom_call.1} parent=11 // pred_check
          %p126 = pneg %p85
        $region14: #{tpu_custom_call.1} parent=11 // pred_check_branch
          %128 = sbr.rel (%p126) target = $region16
        $region15: #{tpu_custom_call.1} parent=11 // pred_region
          _
        $region16: #{tpu_custom_call.1} parent=11 // pred_fallthru
          _
      $region12: #{tpu_custom_call.1} parent=5 // pred_fallthru
        _
      %p129 = scmp.lt.s32.totalorder %s12, 4
      // Predicated region
      $region17: #{tpu_custom_call.1} parent=5 // pred_check
        %p130 = pneg %p129
      $region18: #{tpu_custom_call.1} parent=5 // pred_check_branch
        %132 = sbr.rel (%p130) target = $region20
      $region19: #{tpu_custom_call.1} parent=5 // pred_region
        // Predicated region
        $region21: #{tpu_custom_call.1} parent=19 // pred_check
          %p133 = pneg %p32
        $region22: #{tpu_custom_call.1} parent=19 // pred_check_branch
          %135 = sbr.rel (%p133) target = $region24
        $region23: #{tpu_custom_call.1} parent=19 // pred_region
          %s136 = smul.u32 2, %s12
          %s137 = ssub.s32 7, %s136
          %p138 = scmp.lt.s32.totalorder %s137, 2
          %s139 = scalar_select %p138, %s137, 2
          %s140 = smul.u32 128, %s139
          %p141 = scmp.lt.s32.totalorder %s136, 6
          %s142 = scalar_select %p141, %s136, 6
          %s143 = smul.addr %s142, 8
          %s144 = scalar_lea.vmem %s0, %s143
          %s145 = smul.u32 2, %s12
          %s146 = ssub.s32 7, %s145
          %p147 = scmp.lt.s32.totalorder %s146, 2
          %s148 = scalar_select %p147, %s146, 2
          %s149 = smul.u32 128, %s148
        $region24: #{tpu_custom_call.1} parent=19 // pred_fallthru
          _
        // Predicated region
        $region25: #{tpu_custom_call.1} parent=19 // pred_check
          %p150 = pneg %p58
        $region26: #{tpu_custom_call.1} parent=19 // pred_check_branch
          %152 = sbr.rel (%p150) target = $region28
        $region27: #{tpu_custom_call.1} parent=19 // pred_region
          %s153 = smul.u32 2, %s12
          %s154 = ssub.s32 7, %s153
          %p155 = scmp.lt.s32.totalorder %s154, 2
          %s156 = scalar_select %p155, %s154, 2
          %s157 = smul.u32 128, %s156
          %p158 = scmp.lt.s32.totalorder %s153, 6
          %s159 = scalar_select %p158, %s153, 6
          %s160 = smul.addr %s159, 8
          %s161 = scalar_lea.vmem %s1, %s160
          %s162 = smul.u32 2, %s12
          %s163 = ssub.s32 7, %s162
          %p164 = scmp.lt.s32.totalorder %s163, 2
          %s165 = scalar_select %p164, %s163, 2
          %s166 = smul.u32 128, %s165
        $region28: #{tpu_custom_call.1} parent=19 // pred_fallthru
          _
      $region20: #{tpu_custom_call.1} parent=5 // pred_fallthru
        _
      %p167 = scmp.le.s32.totalorder 1, %s12
      %p168 = scmp.lt.s32.totalorder %s12, 5
      %p169 = pnand %p167, %p168
      %p170 = pneg %p169
      // Predicated region
      $region29: #{tpu_custom_call.1} parent=5 // pred_check
        _
      $region30: #{tpu_custom_call.1} parent=5 // pred_check_branch
        %172 = sbr.rel (%p169) target = $region32
      $region31: #{tpu_custom_call.1} parent=5 // pred_region
        %s173 = ssub.s32 %s12, 1
        %s174 = smul.u32 2, %s17
        %s175 = ssub.s32 7, %s174
        %p176 = scmp.lt.s32.totalorder %s175, 2
        %s177 = scalar_select %p176, %s175, 2
        %s178 = smul.u32 128, %s177
        %p179 = scmp.lt.s32.totalorder %s174, 6
        %s180 = scalar_select %p179, %s174, 6
        %s181 = smul.addr %s180, 8
        %s182 = scalar_lea.vmem %s0, %s181
        %p183 = pneg %p38
        %p184 = pneg %p35
        %s185 = smul.u32 2, %s17
        %s186 = ssub.s32 7, %s185
        %p187 = scmp.lt.s32.totalorder %s186, 2
        %s188 = scalar_select %p187, %s186, 2
        %s189 = smul.u32 128, %s188
        %p190 = scmp.lt.s32.totalorder %s185, 6
        %s191 = scalar_select %p190, %s185, 6
        %s192 = smul.addr %s191, 8
        %s193 = scalar_lea.vmem %s1, %s192
        %p194 = pneg %p64
        %p195 = pneg %p61
        %p196 = pneg %p85
        %p197 = pneg %p82
        %p198 = pneg %p111
        %p199 = pneg %p108
        %s200 = sand.u32 %s98, 1
        %s201 = scalar_lea.sflag [#allocation3], %s200
        %s202 = sand.u32 %s98, 1
        %s203 = scalar_lea.vmem [#allocation2], %s202
        %s204 = smul.u32 2, %s17
        %s205 = ssub.s32 7, %s204
        %p206 = scmp.lt.s32.totalorder %s205, 2
        %s207 = scalar_select %p206, %s205, 2
        %s208 = smul.u32 128, %s207
        %p209 = scmp.lt.s32.totalorder %s204, 6
        %s210 = scalar_select %p209, %s204, 6
        %s211 = smul.addr %s210, 8
        %s212 = scalar_lea.vmem %s0, %s211
        %s213 = smul.u32 2, %s17
        %s214 = ssub.s32 7, %s213
        %p215 = scmp.lt.s32.totalorder %s214, 2
        %s216 = scalar_select %p215, %s214, 2
        %s217 = smul.u32 128, %s216
        %s218 = smul.u32 2, %s17
        %s219 = ssub.s32 7, %s218
        %p220 = scmp.lt.s32.totalorder %s219, 2
        %s221 = scalar_select %p220, %s219, 2
        %s222 = smul.u32 128, %s221
        %p223 = scmp.lt.s32.totalorder %s218, 6
        %s224 = scalar_select %p223, %s218, 6
        %s225 = smul.addr %s224, 8
        %s226 = scalar_lea.vmem %s1, %s225
        %s227 = smul.u32 2, %s17
        %s228 = ssub.s32 7, %s227
        %p229 = scmp.lt.s32.totalorder %s228, 2
        %s230 = scalar_select %p229, %s228, 2
        %s231 = smul.u32 128, %s230
        %v232 = vld [vmem:[%s212] sm:$0xff]
        %v233 = vld [vmem:[%s212 + $0x8] sm:$0xff]
        %v234 = vld [vmem:[%s226] sm:$0xff]
        %v235 = vld [vmem:[%s226 + $0x8] sm:$0xff]
        %v236 = vld [vmem:[%s2] sm:$0x1]
        %v237 = vlaneseq
        %v238 = vand.u32 %v237, 127
        %239 = vset.pattern.permute.xlu0 0
        %240 = vperm.xlu0 %239, %v234
        %v241 = vpop.permute.xlu0 %240
        %242 = vset.pattern.permute.xlu0 0
        %243 = vperm.xlu0 %242, %v235
        %v244 = vpop.permute.xlu0 %243
        %vm245 = vcmp.eq.s32.totalorder %v238, %v241
        %vm246 = vcmp.eq.s32.totalorder %v238, %v244
        %v247 = vlaneseq
        %v248 = vshrl.u32 %v247, 7
        %v249 = vadd.s32 %v248, 8
        %s250 = smul.u32 %s17, 16
        %v251 = vstv %s250
        %v252 = vadd.s32 %v248, %v251
        %v253 = vadd.s32 %v249, %v251
        %vm254 = vcmp.lt.s32.totalorder %v252, 50
        %vm255 = vcmp.lt.s32.totalorder %v253, 50
        %v256 = vsel %vm254, 1, 0
        %v257 = vsel %vm255, 1, 0
        %vm258 = vcmp.eq.s32.totalorder %v256, 1
        %vm259 = vcmp.eq.s32.totalorder %v257, 1
        %v260 = vsel %vm258, %v232, 0.0
        %v261 = vsel %vm259, %v233, 0.0
        %vm262 = vmand %vm245, %vm258
        %vm263 = vmand %vm246, %vm259
        %vm264 = vcmask 261120
        %v265 = vsel %vm264, %v260, -inf
        %266 = vmax.xlane.f32.xlu0 %v265
        %v267 = vpop.xlane.xlu0 %266
        %v268 = vsel %vm264, %v261, -inf
        %269 = vmax.xlane.f32.xlu0 %v268
        %v270 = vpop.xlane.xlu0 %269
        %v271 = vsub.f32 %v260, %v267
        %v272 = vsub.f32 %v261, %v270
        %v273 = vmul.f32 %v271, 1.442695
        %v274 = vpow.pop %v273
        %v275 = vmul.f32 %v272, 1.442695
        %v276 = vpow.pop %v275
        %v277 = vsel %vm264, %v274, 0.0
        %278 = vadd.xlane.f32.xlu0 %v277
        %v279 = vpop.xlane.xlu0 %278
        %v280 = vsel %vm264, %v276, 0.0
        %281 = vadd.xlane.f32.xlu0 %v280
        %v282 = vpop.xlane.xlu0 %281
        %v283 = vlog2.pop %v279
        %v284 = vmul.f32 %v283, 0.6931472
        %v285 = vlog2.pop %v282
        %v286 = vmul.f32 %v285, 0.6931472
        %v287 = vadd.f32 %v267, %v284
        %v288 = vadd.f32 %v270, %v286
        %v290 = vlaneseq
        %v291 = vshrl.u32 %v290, 7
        %v292 = vsub.s32 0, %v291
        %v293 = vrot.slane %v236, %v292
        %v295 = vsel %vm262, %v293, 0.0
        %v296 = vsel %vm263, %v293, 0.0
        %v297 = vsub.f32 %v287, %v260
        %v298 = vsub.f32 %v288, %v261
        %v299 = vmul.f32 %v295, %v297
        %v300 = vmul.f32 %v296, %v298
        %v301 = vsel %vm264, %v299, 0.0
        %v302 = vsel %vm264, %v300, 0.0
        %v303 = vadd.f32 %v301, %v302
        %304 = vadd.xlane.f32.xlu0 %v303
        %v305 = vpop.xlane.xlu0 %304
        %v306 = vrot.slane %v305, 4
        %v307 = vadd.f32 %v305, %v306
        %v308 = vrot.slane %v307, 2
        %v309 = vadd.f32 %v307, %v308
        %v310 = vrot.slane %v309, 1
        %v311 = vadd.f32 %v309, %v310
        %s312 = vtos %v311
        %v313 = vsel %vm264, %v295, 0.0
        %v314 = vsel %vm264, %v296, 0.0
        %v315 = vadd.f32 %v313, %v314
        %316 = vadd.xlane.f32.xlu0 %v315
        %v317 = vpop.xlane.xlu0 %316
        %v318 = vrot.slane %v317, 4
        %v319 = vadd.f32 %v317, %v318
        %v320 = vrot.slane %v319, 2
        %v321 = vadd.f32 %v319, %v320
        %v322 = vrot.slane %v321, 1
        %v323 = vadd.f32 %v321, %v322
        %s324 = vtos %v323
        %vm325 = vcmp.eq.s32.totalorder %v238, 0
        %vm326 = vcmp.eq.s32.totalorder %v238, 1
        %v327 = vstv %s324
        %v328 = vsel %vm326, %v327, 0.0
        %v329 = vstv %s312
        %v330 = vsel %vm325, %v329, %v328
        %331 = vst [vmem:[%s203] sm:$0x1] %v330
        %s332 = sand.u32 %s98, 1
        %s333 = scalar_lea.sflag [#allocation3], %s332
        %s334 = sand.u32 %s98, 1
        %s335 = scalar_lea.vmem [#allocation2], %s334
        // Predicated region
        $region33: #{tpu_custom_call.1} parent=31 // pred_check
          %p336 = pneg %p108
        $region34: #{tpu_custom_call.1} parent=31 // pred_check_branch
          %338 = sbr.rel (%p336) target = $region36
        $region35: #{tpu_custom_call.1} parent=31 // pred_region
          %s340 = ssub.s32 16, 16
          %341 = vsyncadd %s333, %s340
          %s342 = smul.addr %s17, 16
          %s343 = scalar_lea.hbm %s3, %s342
          %s345 = sshll.u32 %s335, 4
          %s346 = int_to_ptr.vmem [resolvable:$true] %s345
          %348 = dma.vmem_to_hbm [thread:$0]  %s346, 16, %s343, %s333
        $region36: #{tpu_custom_call.1} parent=31 // pred_fallthru
          _
      $region32: #{tpu_custom_call.1} parent=5 // pred_fallthru
        _
      %p349 = scmp.le.s32.totalorder 2, %s12
      // Predicated region
      $region37: #{tpu_custom_call.1} parent=5 // pred_check
        %p350 = pneg %p349
      $region38: #{tpu_custom_call.1} parent=5 // pred_check_branch
        %352 = sbr.rel (%p350) target = $region40
      $region39: #{tpu_custom_call.1} parent=5 // pred_region
        %s353 = ssub.s32 %s12, 2
        // Predicated region
        $region41: #{tpu_custom_call.1} parent=39 // pred_check
          %p354 = pneg %p114
        $region42: #{tpu_custom_call.1} parent=39 // pred_check_branch
          %356 = sbr.rel (%p354) target = $region44
        $region43: #{tpu_custom_call.1} parent=39 // pred_region
          %s357 = sand.u32 %s99, 1
          %s358 = scalar_lea.sflag [#allocation3], %s357
          %s359 = sand.u32 %s99, 1
          %s360 = scalar_lea.vmem [#allocation2], %s359
          %361 = dma.done %s358, 16
        $region44: #{tpu_custom_call.1} parent=39 // pred_fallthru
          _
      $region40: #{tpu_custom_call.1} parent=5 // pred_fallthru
        _
    $region6: #{tpu_custom_call.1} parent=1 // loop_footer
      %s16 = sadd.s32 1, %s12
    $region7: #{tpu_custom_call.1} parent=1 // loop_footer_branch
      %11 = sbr.rel target = $region3
    $region8: #{tpu_custom_call.1} parent=1 // loop_exit
      _
    %362 = vsyncpa [#allocation3], 1
    %s363 = scalar_lea.sflag [#allocation3], 1
    %364 = vsyncpa %s363, 1

</llo_original>
